<compile_context>
chip_gen: v7x
topology: tpu7x:2x2x1
jax: 0.10.0
libtpu: 0.0.40
codegen_flags: <defaults>
</compile_context>

<pallas_src>
import jax
import jax.numpy as jnp
from jax.experimental import pallas as pl
from jax.experimental.pallas import tpu as pltpu

BN_EPS = 1e-5
VMEM_LIMIT = 32 * 1024 * 1024   # explicit scoped-VMEM budget; safe on v5e/v6e/v7x


# ---------------------------------------------------------------------------
# Glue: sparse token <-> map helpers (scatter / gather, plain JAX)
# ---------------------------------------------------------------------------
def _pixel_yx(loc_orig, H, W):
    loc = jnp.clip(loc_orig, -1.0, 1.0)
    loc = (loc + 1.0) / 2.0
    xi = jnp.clip(jnp.round(loc[..., 0] * (W - 1)).astype(jnp.int32), 0, W - 1)
    yi = jnp.clip(jnp.round(loc[..., 1] * (H - 1)).astype(jnp.int32), 0, H - 1)
    return yi, xi


def _pixel_index(loc_orig, H, W):
    yi, xi = _pixel_yx(loc_orig, H, W)
    return yi * W + xi  # (B, N0)


def token2map(x, loc_orig, idx_agg, H, W):
    """x: (B, Ns, C) tokens -> (B, H, W, C) map (NHWC).  Reference path only."""
    B, Ns, C = x.shape
    N0 = loc_orig.shape[1]
    idx_hw = _pixel_index(loc_orig, H, W)                       # (B, N0)
    feat = jnp.take_along_axis(x, idx_agg[..., None], axis=1)   # (B, N0, C)

    def one(idx_b, feat_b):
        summed = jax.ops.segment_sum(feat_b, idx_b, num_segments=H * W)
        cnt = jax.ops.segment_sum(jnp.ones((N0,), feat_b.dtype), idx_b,
                                  num_segments=H * W)
        return summed / (cnt[:, None] + 1e-6)

    xmap = jax.vmap(one)(idx_hw, feat)                          # (B, H*W, C)
    return xmap.reshape(B, H, W, C)


def token2map_phases(x, loc_orig, idx_agg, H, W):
    """Scatter tokens straight into the lane-packed 4-phase padded layout.

    Returns (B, 4, Pe_h, Pe_w*C) with phase p = 2*(row%2) + (col%2) of the
    *padded* (H+2, W+2) map.  Border cells never receive tokens -> zeros,
    exactly matching a pad-then-phase-split, but with no extra HBM pre-pass.
    """
    B, Ns, C = x.shape
    N0 = loc_orig.shape[1]
    assert H % 2 == 0 and W % 2 == 0
    Ho, Wo = H // 2, W // 2
    Pe_h, Pe_w = Ho + 1, Wo + 1
    yi, xi = _pixel_yx(loc_orig, H, W)          # (B, N0)
    r, c = yi + 1, xi + 1                       # coords in padded map
    ph = (r % 2) * 2 + (c % 2)
    sid = (ph * Pe_h + r // 2) * Pe_w + c // 2  # phase-major flat segment id
    feat = jnp.take_along_axis(x, idx_agg[..., None], axis=1)   # (B, N0, C)
    nseg = 4 * Pe_h * Pe_w

    def one(sid_b, feat_b):
        summed = jax.ops.segment_sum(feat_b, sid_b, num_segments=nseg)
        cnt = jax.ops.segment_sum(jnp.ones((N0,), feat_b.dtype), sid_b,
                                  num_segments=nseg)
        return summed / (cnt[:, None] + 1e-6)

    phases = jax.vmap(one)(sid, feat)                           # (B, nseg, C)
    return phases.reshape(B, 4, Pe_h, Pe_w * C)                 # free reshape


def map2token(xmap_nhwc, Nt, loc_orig, idx_agg_t, agg_weight_t):
    """(B, H2, W2, C) map -> (B, Nt, C) tokens (nearest-pixel gather + weighted agg)."""
    B, H2, W2, C = xmap_nhwc.shape
    idx_hw = _pixel_index(loc_orig, H2, W2)                     # (B, N0)
    w = agg_weight_t[..., 0]                                    # (B, N0)

    def one(xm, idx_hw_b, idx_t_b, w_b):
        src = xm.reshape(H2 * W2, C)[idx_hw_b]                  # (N0, C)
        num = jax.ops.segment_sum(src * w_b[:, None], idx_t_b, num_segments=Nt)
        den = jax.ops.segment_sum(w_b, idx_t_b, num_segments=Nt) + 1e-6
        return num / den[:, None]

    return jax.vmap(one)(xmap_nhwc, idx_hw, idx_agg_t, w)


def token_downup(x_s, idx_agg_s, idx_agg_t, agg_weight_t, Nt):
    """Aggregate source tokens (B, Ns, C) into target tokens (B, Nt, C)."""
    w = agg_weight_t[..., 0]

    def one(xs, ia_s, ia_t, wb):
        src = xs[ia_s]                                          # (N0, C)
        num = jax.ops.segment_sum(src * wb[:, None], ia_t, num_segments=Nt)
        den = jax.ops.segment_sum(wb, ia_t, num_segments=Nt) + 1e-6
        return num / den[:, None]

    return jax.vmap(one)(x_s, idx_agg_s, idx_agg_t, w)


# ---------------------------------------------------------------------------
# Pallas kernel 1: depthwise 3x3, stride 2, pad 1, lane-packed phases
# ---------------------------------------------------------------------------
def dw_conv3x3_s2_pallas(x_phases, w_dw, Ho, Wo, C):
    """x_phases: (B, 4, Pe_h, Pe_w*C) lane-packed phases; w_dw: (C,1,3,3).

    Returns (B, Ho, Wo, C).
    """
    B = x_phases.shape[0]
    Pe_h = x_phases.shape[2]
    WCp = x_phases.shape[3]                 # Pe_w * C
    WC = Wo * C                             # packed output lane width
    w_kkc = jnp.transpose(w_dw[:, 0, :, :], (1, 2, 0))          # (3, 3, C)
    w_packed = jnp.tile(w_kkc, (1, 1, Wo))                      # (3, 3, Wo*C)

    def kernel(x_ref, w_ref, o_ref):
        acc = jnp.zeros((Ho, WC), jnp.float32)
        # 9 taps; each tap reads one contiguous (Ho, Wo*C) window of one phase,
        # sliced directly from the ref (no full-phase materialization).
        for kh in range(3):
            for kw in range(3):
                ph = (kh % 2) * 2 + (kw % 2)
                r0, c0 = kh // 2, kw // 2
                patch = x_ref[0, ph, r0:r0 + Ho,
                              c0 * C:c0 * C + WC].astype(jnp.float32)
                w_tap = w_ref[kh, kw:kw + 1, :].astype(jnp.float32)  # (1, WC)
                acc = acc + patch * w_tap
        o_ref[...] = acc[None].astype(o_ref.dtype)

    out = pl.pallas_call(
        kernel,
        out_shape=jax.ShapeDtypeStruct((B, Ho, WC), x_phases.dtype),
        grid=(B,),
        in_specs=[pl.BlockSpec((1, 4, Pe_h, WCp), lambda b: (b, 0, 0, 0)),
                  pl.BlockSpec((3, 3, WC), lambda b: (0, 0, 0))],
        out_specs=pl.BlockSpec((1, Ho, WC), lambda b: (b, 0, 0)),
        compiler_params=pltpu.CompilerParams(
            dimension_semantics=("parallel",),
            vmem_limit_bytes=VMEM_LIMIT),
    )(x_phases, w_packed)
    return out.reshape(B, Ho, Wo, C)        # free reshape (unpack lanes)


def _dw_conv_reference(x_map, w_dw):
    B, H, W, C = x_map.shape
    Ho, Wo = H // 2, W // 2
    xp = jnp.pad(x_map, ((0, 0), (1, 1), (1, 1), (0, 0)))
    acc = jnp.zeros((B, Ho, Wo, C), jnp.float32)
    for kh in range(3):
        for kw in range(3):
            acc = acc + (xp[:, kh:kh + 2 * Ho:2, kw:kw + 2 * Wo:2, :]
                         * w_dw[:, 0, kh, kw][None, None, None, :])
    return acc


# ---------------------------------------------------------------------------
# Pallas kernel 2: fused token head
#   relu( (dw_scale*x_down + x_back) @ W_folded + b_folded )
# where norm1/conv/norm2 are pre-folded into (W_folded, b_folded).
# ---------------------------------------------------------------------------
def _head_kernel(xd_ref, xb_ref, s_ref, w_ref, b_ref, o_ref):
    xd = xd_ref[...].astype(jnp.float32)                # (tT, C)
    xb = xb_ref[...].astype(jnp.float32)                # (tT, C)
    y = xd * s_ref[...].astype(jnp.float32) + xb        # dw_skip + residual
    z = jnp.dot(y, w_ref[...].astype(jnp.float32),
                preferred_element_type=jnp.float32)     # norm1+conv+norm2 (MXU)
    z = z + b_ref[...].astype(jnp.float32)              # folded bias
    o_ref[...] = jnp.maximum(z, 0.0).astype(o_ref.dtype)


def head_pallas(x_down, x_back, dw_scale, w_fold, b_fold):
    B, Nt, C = x_down.shape
    Cout = w_fold.shape[1]
    T = B * Nt
    xd = x_down.reshape(T, C)
    xb = x_back.reshape(T, C)

    # Lane-dense output: pad Cout up to a multiple of 128 -> unmasked stores.
    Cout_p = ((Cout + 127) // 128) * 128
    if Cout_p != Cout:
        w_fold = jnp.pad(w_fold, ((0, 0), (0, Cout_p - Cout)))
        b_fold = jnp.pad(b_fold, ((0, Cout_p - Cout),))
    s_row = dw_scale[None, :]                           # (1, C)
    b_row = b_fold[None, :]                             # (1, Cout_p)

    # Large row tile: amortizes ~0.35us/step grid overhead and feeds the MXU
    # full-height passes; 512 rows x 256ch x 4B double-buffered is ~1MB VMEM.
    tT = 512
    if T < tT:
        tT = max(8, ((T + 7) // 8) * 8)
    Tp = ((T + tT - 1) // tT) * tT
    if Tp != T:
        xd = jnp.pad(xd, ((0, Tp - T), (0, 0)))
        xb = jnp.pad(xb, ((0, Tp - T), (0, 0)))

    out = pl.pallas_call(
        _head_kernel,
        out_shape=jax.ShapeDtypeStruct((Tp, Cout_p), x_down.dtype),
        grid=(Tp // tT,),
        in_specs=[pl.BlockSpec((tT, C), lambda i: (i, 0)),
                  pl.BlockSpec((tT, C), lambda i: (i, 0)),
                  pl.BlockSpec((1, C), lambda i: (0, 0)),
                  pl.BlockSpec((C, Cout_p), lambda i: (0, 0)),
                  pl.BlockSpec((1, Cout_p), lambda i: (0, 0))],
        out_specs=pl.BlockSpec((tT, Cout_p), lambda i: (i, 0)),
        compiler_params=pltpu.CompilerParams(
            dimension_semantics=("parallel",),
            vmem_limit_bytes=VMEM_LIMIT),
    )(xd, xb, s_row, w_fold, b_row)
    return out[:T, :Cout].reshape(B, Nt, Cout)


def _head_reference(x_down, x_back, dw_scale, a1, b1, w_t, a2, b2):
    y = x_down * dw_scale + x_back
    y = y * a1 + b1
    z = jnp.einsum("btc,co->bto", y, w_t)
    z = z * a2 + b2
    return jnp.maximum(z, 0.0)


# ---------------------------------------------------------------------------
# Full TokenDownLayer forward
# ---------------------------------------------------------------------------
def _fold_bn(gamma, beta, mean, var, eps=BN_EPS):
    a = gamma / jnp.sqrt(var + eps)
    b = beta - mean * a
    return a, b


def token_down_layer(input_dict, tar_dict, params, use_pallas=True):
    x = input_dict["x"]                       # (B, Ns, C)
    loc_orig = input_dict["loc_orig"]         # (B, N0, 2)
    idx_agg = input_dict["idx_agg"]           # (B, N0)
    H, W = input_dict["map_size"]
    Nt = tar_dict["x"].shape[1]
    idx_agg_t = tar_dict["idx_agg"]           # (B, N0)
    agg_weight_t = tar_dict["agg_weight"]     # (B, N0, 1)
    C = x.shape[-1]
    Ho, Wo = H // 2, W // 2

    # token2map -> depthwise 3x3 s2 -> map2token
    if use_pallas:
        x_phases = token2map_phases(x, loc_orig, idx_agg, H, W)
        x_ds = dw_conv3x3_s2_pallas(x_phases, params["dw_conv_w"], Ho, Wo, C)
    else:
        x_map = token2map(x, loc_orig, idx_agg, H, W)
        x_ds = _dw_conv_reference(x_map, params["dw_conv_w"])
    x_back = map2token(x_ds, Nt, loc_orig, idx_agg_t, agg_weight_t)

    # skip path: token_downup
    x_down = token_downup(x, idx_agg, idx_agg_t, agg_weight_t, Nt)

    # fused head: fold norm1 / norm2 into the 1x1 conv weight + bias.
    dw_scale = params["dw_skip_w"][:, 0, 0, 0]
    a1, b1 = _fold_bn(params["norm1_gamma"], params["norm1_beta"],
                      params["norm1_mean"], params["norm1_var"])
    a2, b2 = _fold_bn(params["norm2_gamma"], params["norm2_beta"],
                      params["norm2_mean"], params["norm2_var"])
    w_t = params["conv_w"][:, :, 0, 0].T      # (C_in, C_out)

    if use_pallas:
        w_fold = (a1[:, None] * w_t) * a2[None, :]          # (C_in, C_out)
        b_fold = (b1 @ w_t) * a2 + b2                       # (C_out,)
        out = head_pallas(x_down, x_back, dw_scale, w_fold, b_fold)
    else:
        out = _head_reference(x_down, x_back, dw_scale, a1, b1, w_t, a2, b2)

    out_dict = dict(tar_dict)
    out_dict["x"] = out
    return out_dict


if __name__ == "__main__":
    B, C_in, C_out = 2, 16, 32
    H = W = 16
    N0 = H * W
    Ns, Nt = 32, 8

    keys = jax.random.split(jax.random.PRNGKey(0), 16)

    # --- inputs -----------------------------------------------------------
    x_s = jax.random.normal(keys[0], (B, Ns, C_in), jnp.float32)
    idx_agg = jax.random.randint(keys[1], (B, N0), 0, Ns)
    agg_weight = jax.random.uniform(keys[2], (B, N0, 1), jnp.float32)
    ys_g, xs_g = jnp.meshgrid(jnp.arange(H), jnp.arange(W), indexing="ij")
    loc = jnp.stack([xs_g / (W - 1) * 2 - 1, ys_g / (H - 1) * 2 - 1],
                    axis=-1).reshape(1, N0, 2).astype(jnp.float32)
    loc_orig = jnp.broadcast_to(loc, (B, N0, 2))

    x_t = jax.random.normal(keys[3], (B, Nt, C_in), jnp.float32)
    idx_agg_t = jax.random.randint(keys[4], (B, N0), 0, Nt)
    agg_weight_t = jax.random.uniform(keys[5], (B, N0, 1), jnp.float32, 0.1, 1.0)

    input_dict = dict(x=x_s, loc_orig=loc_orig, idx_agg=idx_agg,
                      agg_weight=agg_weight, map_size=(H, W))
    tar_dict = dict(x=x_t, idx_agg=idx_agg_t, agg_weight=agg_weight_t)

    # --- deterministic synthetic parameters (shapes per module __init__) ---
    params = dict(
        dw_conv_w=jax.random.normal(keys[6], (C_in, 1, 3, 3), jnp.float32) * 0.2,
        dw_skip_w=jax.random.normal(keys[7], (C_in, 1, 1, 1), jnp.float32) * 0.5 + 1.0,
        norm1_gamma=jax.random.uniform(keys[8], (C_in,), jnp.float32, 0.5, 1.5),
        norm1_beta=jax.random.normal(keys[9], (C_in,), jnp.float32) * 0.1,
        norm1_mean=jax.random.normal(keys[10], (C_in,), jnp.float32) * 0.1,
        norm1_var=jax.random.uniform(keys[11], (C_in,), jnp.float32, 0.5, 1.5),
        conv_w=jax.random.normal(keys[12], (C_out, C_in, 1, 1), jnp.float32) * 0.1,
        norm2_gamma=jax.random.uniform(keys[13], (C_out,), jnp.float32, 0.5, 1.5),
        norm2_beta=jax.random.normal(keys[14], (C_out,), jnp.float32) * 0.1,
        norm2_mean=jax.random.normal(keys[15], (C_out,), jnp.float32) * 0.1,
        norm2_var=jnp.full((C_out,), 1.0, jnp.float32),
    )

    out_dict = token_down_layer(input_dict, tar_dict, params, use_pallas=True)
    out = jax.block_until_ready(out_dict["x"])

    ref = token_down_layer(input_dict, tar_dict, params, use_pallas=False)["x"]
    ref = jax.block_until_ready(ref)

    assert out.shape == (B, Nt, C_out), out.shape
    assert bool(jnp.all(jnp.isfinite(out)))
    assert bool(jnp.all(out >= 0.0))                      # ReLU applied
    assert bool(jnp.allclose(out, ref, rtol=2e-2, atol=2e-2)), \
        float(jnp.max(jnp.abs(out - ref)))

    print("KERNEL_OK")
</pallas_src>

<mosaic_0001>
module attributes {stable_mosaic.version = 11 : i64} {
  func.func @kernel(%arg0: i32, %arg1: memref<1x4x9x144xf32, #tpu.memory_space<vmem>>, %arg2: memref<3x3x128xf32, #tpu.memory_space<vmem>>, %arg3: memref<1x8x128xf32, #tpu.memory_space<vmem>>) attributes {dimension_semantics = [#tpu.dimension_semantics<parallel>], iteration_bounds = array<i64: 2>, scalar_prefetch = 0 : i64, scratch_operands = 0 : i64, tpu.core_type = #tpu.core_type<tc>, window_params = [{transform_indices = @transform_0, window_bounds = array<i64: 1, 4, 9, 144>}, {pipeline_mode = #tpu.pipeline_mode<synchronous>, transform_indices = @transform_1, window_bounds = array<i64: 3, 3, 128>}, {transform_indices = @transform_2, window_bounds = array<i64: 1, 8, 128>}]} {
    %cst = arith.constant 0.000000e+00 : f32
    %0 = vector.broadcast %cst : f32 to vector<8x128xf32>
    %c0 = arith.constant 0 : index
    %c0_0 = arith.constant 0 : index
    %c0_1 = arith.constant 0 : index
    %c0_2 = arith.constant 0 : index
    %1 = vector.load %arg1[%c0, %c0_0, %c0_1, %c0_2] : memref<1x4x9x144xf32, #tpu.memory_space<vmem>>, vector<1x1x8x128xf32>
    %2 = vector.shape_cast %1 : vector<1x1x8x128xf32> to vector<8x128xf32>
    %c0_3 = arith.constant 0 : index
    %c0_4 = arith.constant 0 : index
    %c0_5 = arith.constant 0 : index
    %3 = vector.load %arg2[%c0_3, %c0_4, %c0_5] : memref<3x3x128xf32, #tpu.memory_space<vmem>>, vector<1x1x128xf32>
    %4 = vector.shape_cast %3 : vector<1x1x128xf32> to vector<1x128xf32>
    %5 = vector.broadcast %4 : vector<1x128xf32> to vector<8x128xf32>
    %6 = arith.mulf %2, %5 : vector<8x128xf32>
    %7 = arith.addf %0, %6 : vector<8x128xf32>
    %c0_6 = arith.constant 0 : index
    %c1 = arith.constant 1 : index
    %c0_7 = arith.constant 0 : index
    %c0_8 = arith.constant 0 : index
    %8 = vector.load %arg1[%c0_6, %c1, %c0_7, %c0_8] : memref<1x4x9x144xf32, #tpu.memory_space<vmem>>, vector<1x1x8x128xf32>
    %9 = vector.shape_cast %8 : vector<1x1x8x128xf32> to vector<8x128xf32>
    %c0_9 = arith.constant 0 : index
    %c1_10 = arith.constant 1 : index
    %c0_11 = arith.constant 0 : index
    %10 = vector.load %arg2[%c0_9, %c1_10, %c0_11] : memref<3x3x128xf32, #tpu.memory_space<vmem>>, vector<1x1x128xf32>
    %11 = vector.shape_cast %10 : vector<1x1x128xf32> to vector<1x128xf32>
    %12 = vector.broadcast %11 : vector<1x128xf32> to vector<8x128xf32>
    %13 = arith.mulf %9, %12 : vector<8x128xf32>
    %14 = arith.addf %7, %13 : vector<8x128xf32>
    %c0_12 = arith.constant 0 : index
    %c0_13 = arith.constant 0 : index
    %c0_14 = arith.constant 0 : index
    %c16 = arith.constant 16 : index
    %15 = vector.load %arg1[%c0_12, %c0_13, %c0_14, %c16] : memref<1x4x9x144xf32, #tpu.memory_space<vmem>>, vector<1x1x8x128xf32>
    %16 = vector.shape_cast %15 : vector<1x1x8x128xf32> to vector<8x128xf32>
    %c0_15 = arith.constant 0 : index
    %c2 = arith.constant 2 : index
    %c0_16 = arith.constant 0 : index
    %17 = vector.load %arg2[%c0_15, %c2, %c0_16] : memref<3x3x128xf32, #tpu.memory_space<vmem>>, vector<1x1x128xf32>
    %18 = vector.shape_cast %17 : vector<1x1x128xf32> to vector<1x128xf32>
    %19 = vector.broadcast %18 : vector<1x128xf32> to vector<8x128xf32>
    %20 = arith.mulf %16, %19 : vector<8x128xf32>
    %21 = arith.addf %14, %20 : vector<8x128xf32>
    %c0_17 = arith.constant 0 : index
    %c2_18 = arith.constant 2 : index
    %c0_19 = arith.constant 0 : index
    %c0_20 = arith.constant 0 : index
    %22 = vector.load %arg1[%c0_17, %c2_18, %c0_19, %c0_20] : memref<1x4x9x144xf32, #tpu.memory_space<vmem>>, vector<1x1x8x128xf32>
    %23 = vector.shape_cast %22 : vector<1x1x8x128xf32> to vector<8x128xf32>
    %c1_21 = arith.constant 1 : index
    %c0_22 = arith.constant 0 : index
    %c0_23 = arith.constant 0 : index
    %24 = vector.load %arg2[%c1_21, %c0_22, %c0_23] : memref<3x3x128xf32, #tpu.memory_space<vmem>>, vector<1x1x128xf32>
    %25 = vector.shape_cast %24 : vector<1x1x128xf32> to vector<1x128xf32>
    %26 = vector.broadcast %25 : vector<1x128xf32> to vector<8x128xf32>
    %27 = arith.mulf %23, %26 : vector<8x128xf32>
    %28 = arith.addf %21, %27 : vector<8x128xf32>
    %c0_24 = arith.constant 0 : index
    %c3 = arith.constant 3 : index
    %c0_25 = arith.constant 0 : index
    %c0_26 = arith.constant 0 : index
    %29 = vector.load %arg1[%c0_24, %c3, %c0_25, %c0_26] : memref<1x4x9x144xf32, #tpu.memory_space<vmem>>, vector<1x1x8x128xf32>
    %30 = vector.shape_cast %29 : vector<1x1x8x128xf32> to vector<8x128xf32>
    %c1_27 = arith.constant 1 : index
    %c1_28 = arith.constant 1 : index
    %c0_29 = arith.constant 0 : index
    %31 = vector.load %arg2[%c1_27, %c1_28, %c0_29] : memref<3x3x128xf32, #tpu.memory_space<vmem>>, vector<1x1x128xf32>
    %32 = vector.shape_cast %31 : vector<1x1x128xf32> to vector<1x128xf32>
    %33 = vector.broadcast %32 : vector<1x128xf32> to vector<8x128xf32>
    %34 = arith.mulf %30, %33 : vector<8x128xf32>
    %35 = arith.addf %28, %34 : vector<8x128xf32>
    %c0_30 = arith.constant 0 : index
    %c2_31 = arith.constant 2 : index
    %c0_32 = arith.constant 0 : index
    %c16_33 = arith.constant 16 : index
    %36 = vector.load %arg1[%c0_30, %c2_31, %c0_32, %c16_33] : memref<1x4x9x144xf32, #tpu.memory_space<vmem>>, vector<1x1x8x128xf32>
    %37 = vector.shape_cast %36 : vector<1x1x8x128xf32> to vector<8x128xf32>
    %c1_34 = arith.constant 1 : index
    %c2_35 = arith.constant 2 : index
    %c0_36 = arith.constant 0 : index
    %38 = vector.load %arg2[%c1_34, %c2_35, %c0_36] : memref<3x3x128xf32, #tpu.memory_space<vmem>>, vector<1x1x128xf32>
    %39 = vector.shape_cast %38 : vector<1x1x128xf32> to vector<1x128xf32>
    %40 = vector.broadcast %39 : vector<1x128xf32> to vector<8x128xf32>
    %41 = arith.mulf %37, %40 : vector<8x128xf32>
    %42 = arith.addf %35, %41 : vector<8x128xf32>
    %c0_37 = arith.constant 0 : index
    %c0_38 = arith.constant 0 : index
    %c1_39 = arith.constant 1 : index
    %c0_40 = arith.constant 0 : index
    %43 = vector.load %arg1[%c0_37, %c0_38, %c1_39, %c0_40] : memref<1x4x9x144xf32, #tpu.memory_space<vmem>>, vector<1x1x8x128xf32>
    %44 = vector.shape_cast %43 : vector<1x1x8x128xf32> to vector<8x128xf32>
    %c2_41 = arith.constant 2 : index
    %c0_42 = arith.constant 0 : index
    %c0_43 = arith.constant 0 : index
    %45 = vector.load %arg2[%c2_41, %c0_42, %c0_43] : memref<3x3x128xf32, #tpu.memory_space<vmem>>, vector<1x1x128xf32>
    %46 = vector.shape_cast %45 : vector<1x1x128xf32> to vector<1x128xf32>
    %47 = vector.broadcast %46 : vector<1x128xf32> to vector<8x128xf32>
    %48 = arith.mulf %44, %47 : vector<8x128xf32>
    %49 = arith.addf %42, %48 : vector<8x128xf32>
    %c0_44 = arith.constant 0 : index
    %c1_45 = arith.constant 1 : index
    %c1_46 = arith.constant 1 : index
    %c0_47 = arith.constant 0 : index
    %50 = vector.load %arg1[%c0_44, %c1_45, %c1_46, %c0_47] : memref<1x4x9x144xf32, #tpu.memory_space<vmem>>, vector<1x1x8x128xf32>
    %51 = vector.shape_cast %50 : vector<1x1x8x128xf32> to vector<8x128xf32>
    %c2_48 = arith.constant 2 : index
    %c1_49 = arith.constant 1 : index
    %c0_50 = arith.constant 0 : index
    %52 = vector.load %arg2[%c2_48, %c1_49, %c0_50] : memref<3x3x128xf32, #tpu.memory_space<vmem>>, vector<1x1x128xf32>
    %53 = vector.shape_cast %52 : vector<1x1x128xf32> to vector<1x128xf32>
    %54 = vector.broadcast %53 : vector<1x128xf32> to vector<8x128xf32>
    %55 = arith.mulf %51, %54 : vector<8x128xf32>
    %56 = arith.addf %49, %55 : vector<8x128xf32>
    %c0_51 = arith.constant 0 : index
    %c0_52 = arith.constant 0 : index
    %c1_53 = arith.constant 1 : index
    %c16_54 = arith.constant 16 : index
    %57 = vector.load %arg1[%c0_51, %c0_52, %c1_53, %c16_54] : memref<1x4x9x144xf32, #tpu.memory_space<vmem>>, vector<1x1x8x128xf32>
    %58 = vector.shape_cast %57 : vector<1x1x8x128xf32> to vector<8x128xf32>
    %c2_55 = arith.constant 2 : index
    %c2_56 = arith.constant 2 : index
    %c0_57 = arith.constant 0 : index
    %59 = vector.load %arg2[%c2_55, %c2_56, %c0_57] : memref<3x3x128xf32, #tpu.memory_space<vmem>>, vector<1x1x128xf32>
    %60 = vector.shape_cast %59 : vector<1x1x128xf32> to vector<1x128xf32>
    %61 = vector.broadcast %60 : vector<1x128xf32> to vector<8x128xf32>
    %62 = arith.mulf %58, %61 : vector<8x128xf32>
    %63 = arith.addf %56, %62 : vector<8x128xf32>
    %64 = vector.shape_cast %63 : vector<8x128xf32> to vector<1x8x128xf32>
    %c0_58 = arith.constant 0 : index
    %c0_59 = arith.constant 0 : index
    %c0_60 = arith.constant 0 : index
    %65 = vector.load %arg3[%c0_58, %c0_59, %c0_60] : memref<1x8x128xf32, #tpu.memory_space<vmem>>, vector<1x8x128xf32>
    tpu.vector_store %arg3[%c0_58, %c0_59, %c0_60], %64 {strides = array<i32>} : memref<1x8x128xf32, #tpu.memory_space<vmem>>, vector<1x8x128xf32>,
    return
  }
  func.func @transform_0(%arg0: i32) -> (i32, i32, i32, i32) {
    %c0_i32 = arith.constant 0 : i32
    %c0_i32_0 = arith.constant 0 : i32
    %c0_i32_1 = arith.constant 0 : i32
    %c0_i32_2 = arith.constant 0 : i32
    return %arg0, %c0_i32, %c0_i32_0, %c0_i32_1 : i32, i32, i32, i32
  }
  func.func @transform_1(%arg0: i32) -> (i32, i32, i32) {
    %c0_i32 = arith.constant 0 : i32
    %c0_i32_0 = arith.constant 0 : i32
    %c0_i32_1 = arith.constant 0 : i32
    %c0_i32_2 = arith.constant 0 : i32
    return %c0_i32, %c0_i32_0, %c0_i32_1 : i32, i32, i32
  }
  func.func @transform_2(%arg0: i32) -> (i32, i32, i32) {
    %c0_i32 = arith.constant 0 : i32
    %c0_i32_0 = arith.constant 0 : i32
    %c0_i32_1 = arith.constant 0 : i32
    return %arg0, %c0_i32, %c0_i32_0 : i32, i32, i32
  }
}

</mosaic_0001>

<llo_original>
// kernel: tpu_custom_call.1
$region0: #{tpu_custom_call.1}
  #allocation0 [shape = 'u32[]', space=smem, size = 0x4, offset = 0x4, fixed_abs, tag = 'smem constant byte address 0x4 - core index']
  #allocation1 [shape = 'u32[144,128]{1,0:T(1,128)}', space=vmem, size = 0x12000, scoped, tag = 'internal scratch']
  %s0 = inlined_call_operand.vmem [shape: f32[2,4,9,144], index: 0, kind: input, shape index: {}]
  %s1 = inlined_call_operand.vmem [shape: f32[3,3,128], index: 1, kind: input, shape index: {}]
  %s2 = inlined_call_operand.hbm [shape: f32[2,8,128], index: 2, kind: output, shape index: {}]
  %s3 = sld [smem:[#allocation0]]
  $region41: #{tpu_custom_call.1} parent=0
    _
  %s5 = ssub.s32 1, %s3
  %s6 = scalar_select 0, %s5, %s3
  $region1: #{tpu_custom_call.1} parent=0
    #allocation2 [shape = 'u8[8192]{0}', space=vmem, size = 0x2000, scoped, tag = 'output window, operand 0']
    #allocation3 [shape = 's32[2]{0}', space=sflag, size = 0x8, scoped, tag = 'scoped memory for tpu_custom_call.1']
    %7 = vsyncpa [#allocation3], 0
    %s8 = scalar_lea.sflag [#allocation3], 1
    %9 = vsyncpa %s8, 0
    loop: start=0, step=1, limit=4
    $region2: #{tpu_custom_call.1} parent=1 // loop_pre_header
      _
    $region3: #{tpu_custom_call.1} parent=1 // loop_header
      %s11 = sphi 0, %s15
      %p12 = scmp.ge.s32.totalorder %s11, 4
      %s21 = sphi 0, %s23
      %s24 = sphi 0, %s21
      %s25 = sphi 0, %s24
      %s41 = sphi 0, %s25
      %s45 = sphi 0, %s45
      %s47 = sphi 0, %s45
      %s48 = sphi 0, %s47
      %s62 = sphi 0, %s48
      %s68 = sphi 0, %s70
      %s71 = sphi 0, %s68
      %s72 = sphi 0, %s71
      %s88 = sphi 0, %s72
    $region4: #{tpu_custom_call.1} parent=1 // loop_header_branch
      %14 = sbr.rel (%p12) target = $region8
    $region5: #{tpu_custom_call.1} parent=1 // loop_body
      %s16 = ssub.s32 %s11, 1
      %s17 = ssub.s32 %s11, 2
      %s18 = sadd.s32 %s11, 1
      %s19 = ssub.s32 %s11, %s18
      %p20 = scmp.eq.s32.totalorder %s19, 0
      %s22 = sadd.s32 %s21, 1
      %s23 = scalar_select %p20, %s21, %s22
      %p26 = pneg %p20
      %p27 = scmp.eq.s32.totalorder %s11, 1
      %p28 = por %p26, %p27
      %p29 = scmp.ne.s32.totalorder %s21, %s24
      %p30 = scmp.eq.s32.totalorder %s11, 0
      %p31 = por %p29, %p30
      %p32 = scmp.ne.s32.totalorder %s21, %s24
      %p33 = scmp.eq.s32.totalorder %s16, 1
      %p34 = por %p32, %p33
      %p35 = scmp.ne.s32.totalorder %s24, %s25
      %p36 = scmp.eq.s32.totalorder %s16, 0
      %p37 = por %p35, %p36
      %p38 = scmp.ne.s32.totalorder %s24, %s25
      %p39 = scmp.eq.s32.totalorder %s17, 1
      %p40 = por %p38, %p39
      %p42 = scmp.ne.s32.totalorder %s25, %s41
      %p43 = scmp.eq.s32.totalorder %s17, 0
      %p44 = por %p42, %p43
      %s46 = sadd.s32 %s45, 1
      %p49 = scmp.eq.s32.totalorder %s11, 1
      %p50 = scmp.ne.s32.totalorder %s45, %s47
      %p51 = scmp.eq.s32.totalorder %s11, 0
      %p52 = por %p50, %p51
      %p53 = scmp.ne.s32.totalorder %s45, %s47
      %p54 = scmp.eq.s32.totalorder %s16, 1
      %p55 = por %p53, %p54
      %p56 = scmp.ne.s32.totalorder %s47, %s48
      %p57 = scmp.eq.s32.totalorder %s16, 0
      %p58 = por %p56, %p57
      %p59 = scmp.ne.s32.totalorder %s47, %s48
      %p60 = scmp.eq.s32.totalorder %s17, 1
      %p61 = por %p59, %p60
      %p63 = scmp.ne.s32.totalorder %s48, %s62
      %p64 = scmp.eq.s32.totalorder %s17, 0
      %p65 = por %p63, %p64
      %s66 = ssub.s32 %s11, %s18
      %p67 = scmp.eq.s32.totalorder %s66, 0
      %s69 = sadd.s32 %s68, 1
      %s70 = scalar_select %p67, %s68, %s69
      %p73 = pneg %p67
      %p74 = scmp.eq.s32.totalorder %s11, 1
      %p75 = por %p73, %p74
      %p76 = scmp.ne.s32.totalorder %s68, %s71
      %p77 = scmp.eq.s32.totalorder %s11, 0
      %p78 = por %p76, %p77
      %p79 = scmp.ne.s32.totalorder %s68, %s71
      %p80 = scmp.eq.s32.totalorder %s16, 1
      %p81 = por %p79, %p80
      %p82 = scmp.ne.s32.totalorder %s71, %s72
      %p83 = scmp.eq.s32.totalorder %s16, 0
      %p84 = por %p82, %p83
      %p85 = scmp.ne.s32.totalorder %s71, %s72
      %p86 = scmp.eq.s32.totalorder %s17, 1
      %p87 = por %p85, %p86
      %p89 = scmp.ne.s32.totalorder %s72, %s88
      %p90 = scmp.eq.s32.totalorder %s17, 0
      %p91 = por %p89, %p90
      %p92 = scmp.le.s32.totalorder 1, %s11
      %p93 = scmp.lt.s32.totalorder %s11, 3
      %p94 = pnand %p92, %p93
      %p95 = pneg %p94
      // Predicated region
      $region9: #{tpu_custom_call.1} parent=5 // pred_check
        _
      $region10: #{tpu_custom_call.1} parent=5 // pred_check_branch
        %97 = sbr.rel (%p94) target = $region12
      $region11: #{tpu_custom_call.1} parent=5 // pred_region
        %s98 = ssub.s32 %s11, 1
        // Predicated region
        $region13: #{tpu_custom_call.1} parent=11 // pred_check
          %p99 = pneg %p58
        $region14: #{tpu_custom_call.1} parent=11 // pred_check_branch
          %101 = sbr.rel (%p99) target = $region16
        $region15: #{tpu_custom_call.1} parent=11 // pred_region
          _
        $region16: #{tpu_custom_call.1} parent=11 // pred_fallthru
          _
      $region12: #{tpu_custom_call.1} parent=5 // pred_fallthru
        _
      %p102 = scmp.lt.s32.totalorder %s11, 2
      // Predicated region
      $region17: #{tpu_custom_call.1} parent=5 // pred_check
        %p103 = pneg %p102
      $region18: #{tpu_custom_call.1} parent=5 // pred_check_branch
        %105 = sbr.rel (%p103) target = $region20
      $region19: #{tpu_custom_call.1} parent=5 // pred_region
        // Predicated region
        $region21: #{tpu_custom_call.1} parent=19 // pred_check
          %p106 = pneg %p31
        $region22: #{tpu_custom_call.1} parent=19 // pred_check_branch
          %108 = sbr.rel (%p106) target = $region24
        $region23: #{tpu_custom_call.1} parent=19 // pred_region
          %p109 = scmp.lt.s32.totalorder %s11, 1
          %s110 = scalar_select %p109, %s11, 1
          %s111 = smul.addr %s110, 16
          %s112 = smul.addr %s111, 8
          %s113 = scalar_lea.vmem %s0, %s112
        $region24: #{tpu_custom_call.1} parent=19 // pred_fallthru
          _
      $region20: #{tpu_custom_call.1} parent=5 // pred_fallthru
        _
      %p114 = scmp.le.s32.totalorder 1, %s11
      %p115 = scmp.lt.s32.totalorder %s11, 3
      %p116 = pnand %p114, %p115
      %p117 = pneg %p116
      // Predicated region
      $region25: #{tpu_custom_call.1} parent=5 // pred_check
        _
      $region26: #{tpu_custom_call.1} parent=5 // pred_check_branch
        %119 = sbr.rel (%p116) target = $region28
      $region27: #{tpu_custom_call.1} parent=5 // pred_region
        %s120 = ssub.s32 %s11, 1
        %p121 = scmp.lt.s32.totalorder %s16, 1
        %s122 = scalar_select %p121, %s16, 1
        %s123 = smul.addr %s122, 16
        %s124 = smul.addr %s123, 8
        %s125 = scalar_lea.vmem %s0, %s124
        %p126 = pneg %p37
        %p127 = pneg %p34
        %p128 = pneg %p58
        %p129 = pneg %p55
        %p130 = pneg %p84
        %p131 = pneg %p81
        %s132 = sand.u32 %s71, 1
        %s133 = scalar_lea.sflag [#allocation3], %s132
        %s134 = sand.u32 %s71, 1
        %s135 = smul.addr %s134, 8
        %s136 = scalar_lea.vmem [#allocation2], %s135
        %p137 = scmp.lt.s32.totalorder %s16, 1
        %s138 = scalar_select %p137, %s16, 1
        %s139 = smul.addr %s138, 16
        %s140 = smul.addr %s139, 8
        %s141 = scalar_lea.vmem %s0, %s140
        %v142 = vld [vmem:[%s141] sm:$0xff]
        %v143 = vld [vmem:[%s1] sm:$0x1]
        %v144 = vlaneseq
        %v145 = vshrl.u32 %v144, 7
        %v146 = vsub.s32 0, %v145
        %v147 = vrot.slane %v143, %v146
        %v148 = vmul.f32 %v142, %v147
        %v149 = vadd.f32 %v148, 0.0
        %s150 = scalar_lea.vmem %s141, 32
        %v151 = vld [vmem:[%s150] sm:$0xff]
        %v152 = vld [vmem:[%s1 + $0x1] sm:$0x1]
        %v153 = vlaneseq
        %v154 = vshrl.u32 %v153, 7
        %v155 = vsub.s32 0, %v154
        %v156 = vrot.slane %v152, %v155
        %v157 = vmul.f32 %v151, %v156
        %v158 = vadd.f32 %v149, %v157
        %v159 = vld [vmem:[%s141 + $0x8] sm:$0xff]
        %v160 = vld [vmem:[%s1 + $0x2] sm:$0x1]
        %v161 = vlaneseq
        %v162 = vshrl.u32 %v161, 7
        %v163 = vsub.s32 0, %v162
        %v164 = vrot.slane %v160, %v163
        %166 = vrot.lane.b32.xlu0 %v164, 16
        %v167 = vpop.permute.xlu0 %166
        %v169 = vmul.f32 %v142, %v167
        %v170 = vmul.f32 %v159, %v167
        %173 = vrot.lane.b32.xlu0 %v169, 112
        %v174 = vpop.permute.xlu0 %173
        %175 = vrot.lane.b32.xlu0 %v170, 112
        %v176 = vpop.permute.xlu0 %175
        %vm177 = vcmask 916480
        %v178 = vsel %vm177, %v174, %v176
        %v180 = vadd.f32 %v158, %v178
        %s181 = scalar_lea.vmem %s141, 64
        %v182 = vld [vmem:[%s181] sm:$0xff]
        %s183 = scalar_lea.vmem %s1, 4
        %v184 = vld [vmem:[%s183] sm:$0x1]
        %v185 = vlaneseq
        %v186 = vshrl.u32 %v185, 7
        %v187 = vsub.s32 0, %v186
        %v188 = vrot.slane %v184, %v187
        %v189 = vmul.f32 %v182, %v188
        %v190 = vadd.f32 %v180, %v189
        %s191 = scalar_lea.vmem %s141, 96
        %v192 = vld [vmem:[%s191] sm:$0xff]
        %v193 = vld [vmem:[%s183 + $0x1] sm:$0x1]
        %v194 = vlaneseq
        %v195 = vshrl.u32 %v194, 7
        %v196 = vsub.s32 0, %v195
        %v197 = vrot.slane %v193, %v196
        %v198 = vmul.f32 %v192, %v197
        %v199 = vadd.f32 %v190, %v198
        %v200 = vld [vmem:[%s181 + $0x8] sm:$0xff]
        %v201 = vld [vmem:[%s183 + $0x2] sm:$0x1]
        %v202 = vlaneseq
        %v203 = vshrl.u32 %v202, 7
        %v204 = vsub.s32 0, %v203
        %v205 = vrot.slane %v201, %v204
        %207 = vrot.lane.b32.xlu0 %v205, 16
        %v208 = vpop.permute.xlu0 %207
        %v210 = vmul.f32 %v182, %v208
        %v211 = vmul.f32 %v200, %v208
        %214 = vrot.lane.b32.xlu0 %v210, 112
        %v215 = vpop.permute.xlu0 %214
        %216 = vrot.lane.b32.xlu0 %v211, 112
        %v217 = vpop.permute.xlu0 %216
        %v218 = vsel %vm177, %v215, %v217
        %v220 = vadd.f32 %v199, %v218
        %v221 = vld [vmem:[%s141] sm:$0xfe]
        %v222 = vld [vmem:[%s141 + $0x10] sm:$0x1]
        %s223 = scalar_lea.vmem %s1, 8
        %v224 = vld [vmem:[%s223] sm:$0x1]
        %v225 = vlaneseq
        %v226 = vshrl.u32 %v225, 7
        %v227 = vsub.s32 0, %v226
        %v228 = vrot.slane %v224, %v227
        %v229 = vmul.f32 %v221, %v228
        %v230 = vmul.f32 %v222, %v228
        %vm233 = vcmask 1046528
        %v234 = vrot.slane %v229, 1
        %v235 = vrot.slane %v230, 1
        %v236 = vsel %vm233, %v234, %v235
        %v238 = vadd.f32 %v220, %v236
        %v239 = vld [vmem:[%s150] sm:$0xfe]
        %v240 = vld [vmem:[%s150 + $0x10] sm:$0x1]
        %v241 = vld [vmem:[%s223 + $0x1] sm:$0x1]
        %v242 = vlaneseq
        %v243 = vshrl.u32 %v242, 7
        %v244 = vsub.s32 0, %v243
        %v245 = vrot.slane %v241, %v244
        %v246 = vmul.f32 %v239, %v245
        %v247 = vmul.f32 %v240, %v245
        %v250 = vrot.slane %v246, 1
        %v251 = vrot.slane %v247, 1
        %v252 = vsel %vm233, %v250, %v251
        %v254 = vadd.f32 %v238, %v252
        %v255 = vld [vmem:[%s141 + $0x8] sm:$0xfe]
        %v256 = vld [vmem:[%s141 + $0x18] sm:$0x1]
        %v257 = vld [vmem:[%s223 + $0x2] sm:$0x1]
        %v258 = vlaneseq
        %v259 = vshrl.u32 %v258, 7
        %v260 = vsub.s32 0, %v259
        %v261 = vrot.slane %v257, %v260
        %263 = vrot.lane.b32.xlu0 %v261, 16
        %v264 = vpop.permute.xlu0 %263
        %v266 = vmul.f32 %v221, %v264
        %v267 = vmul.f32 %v255, %v264
        %v268 = vmul.f32 %v222, %v264
        %v269 = vmul.f32 %v256, %v264
        %v274 = vrot.slane %v266, 1
        %v275 = vrot.slane %v268, 1
        %v276 = vsel %vm233, %v274, %v275
        %v277 = vrot.slane %v267, 1
        %v278 = vrot.slane %v269, 1
        %v279 = vsel %vm233, %v277, %v278
        %280 = vrot.lane.b32.xlu0 %v276, 112
        %v281 = vpop.permute.xlu0 %280
        %282 = vrot.lane.b32.xlu0 %v279, 112
        %v283 = vpop.permute.xlu0 %282
        %v284 = vsel %vm177, %v281, %v283
        %v286 = vadd.f32 %v254, %v284
        %287 = vst [vmem:[%s136] sm:$0xff] %v286
        %s288 = sand.u32 %s71, 1
        %s289 = scalar_lea.sflag [#allocation3], %s288
        %s290 = sand.u32 %s71, 1
        %s291 = smul.addr %s290, 8
        %s292 = scalar_lea.vmem [#allocation2], %s291
        // Predicated region
        $region29: #{tpu_custom_call.1} parent=27 // pred_check
          %p293 = pneg %p81
        $region30: #{tpu_custom_call.1} parent=27 // pred_check_branch
          %295 = sbr.rel (%p293) target = $region32
        $region31: #{tpu_custom_call.1} parent=27 // pred_region
          %s297 = ssub.s32 128, 128
          %298 = vsyncadd %s289, %s297
          %s299 = smul.addr %s16, 128
          %s300 = scalar_lea.hbm %s2, %s299
          %s302 = sshll.u32 %s292, 4
          %s303 = int_to_ptr.vmem [resolvable:$true] %s302
          %305 = dma.vmem_to_hbm [thread:$0]  %s303, 128, %s300, %s289
        $region32: #{tpu_custom_call.1} parent=27 // pred_fallthru
          _
      $region28: #{tpu_custom_call.1} parent=5 // pred_fallthru
        _
      %p306 = scmp.le.s32.totalorder 2, %s11
      // Predicated region
      $region33: #{tpu_custom_call.1} parent=5 // pred_check
        %p307 = pneg %p306
      $region34: #{tpu_custom_call.1} parent=5 // pred_check_branch
        %309 = sbr.rel (%p307) target = $region36
      $region35: #{tpu_custom_call.1} parent=5 // pred_region
        %s310 = ssub.s32 %s11, 2
        // Predicated region
        $region37: #{tpu_custom_call.1} parent=35 // pred_check
          %p311 = pneg %p87
        $region38: #{tpu_custom_call.1} parent=35 // pred_check_branch
          %313 = sbr.rel (%p311) target = $region40
        $region39: #{tpu_custom_call.1} parent=35 // pred_region
          %s314 = sand.u32 %s72, 1
          %s315 = scalar_lea.sflag [#allocation3], %s314
          %s316 = sand.u32 %s72, 1
          %s317 = smul.addr %s316, 8
          %s318 = scalar_lea.vmem [#allocation2], %s317
          %319 = dma.done %s315, 128
        $region40: #{tpu_custom_call.1} parent=35 // pred_fallthru
          _
      $region36: #{tpu_custom_call.1} parent=5 // pred_fallthru
        _
    $region6: #{tpu_custom_call.1} parent=1 // loop_footer
      %s15 = sadd.s32 1, %s11
    $region7: #{tpu_custom_call.1} parent=1 // loop_footer_branch
      %10 = sbr.rel target = $region3
    $region8: #{tpu_custom_call.1} parent=1 // loop_exit
      _
    %320 = vsyncpa [#allocation3], 1
    %s321 = scalar_lea.sflag [#allocation3], 1
    %322 = vsyncpa %s321, 1

</llo_original>
